<compile_context>
chip_gen: v7x
topology: tpu7x:2x2x1
jax: 0.10.0
libtpu: 0.0.40
codegen_flags: <defaults>
</compile_context>

<pallas_src>
import functools

import jax
import jax.numpy as jnp
from jax.experimental import pallas as pl
from jax.experimental.pallas import tpu as pltpu

LANE = 128
SUBLANE = 8


def _round_up(x: int, m: int) -> int:
    return ((x + m - 1) // m) * m


def _cdiv(a: int, b: int) -> int:
    return (a + b - 1) // b


def _mlp_kernel(*refs, n_layers: int):
    """Fused MLP. refs = [x, w0, b0, w1, b1, ..., w_{L-1}, b_{L-1}, out].

    All matmuls hit the MXU with f32 accumulation; intermediates stay in vregs/VMEM,
    only the final result tile is stored.
    """
    x_ref = refs[0]
    out_ref = refs[-1]
    h = x_ref[...]
    for i in range(n_layers):
        w = refs[1 + 2 * i][...]
        b = refs[2 + 2 * i][...]          # (1, N), f32
        h = jnp.dot(h.astype(w.dtype), w, preferred_element_type=jnp.float32) + b
        if i < n_layers - 1:
            h = jnp.maximum(h, 0.0)       # ReLU; Dropout(p=0.0 / eval) is identity
    out_ref[...] = h.astype(out_ref.dtype)
    # TODO(synk): training-mode dropout masking (pltpu.prng_seed + prng_random_bits) not implemented.


def custom_nn_forward(x, params, *, tm: int = 4096, cast_to_bf16: bool = False):
    """Forward pass of CustomNN as one fused pallas_call.

    Hidden layers: Linear + ReLU (+ Dropout = identity). Last layer: plain Linear.
    Small batches (<= 256 padded rows) use one full-array block (launch-latency bound);
    larger batches use a 1-D grid over rows with >= 2 tiles.
    """
    M, K = x.shape
    n_layers = len(params)
    num_classes = params[-1][0].shape[1]

    compute_dtype = jnp.bfloat16 if cast_to_bf16 else x.dtype
    item_in = jnp.dtype(compute_dtype).itemsize

    xk = x.astype(compute_dtype)
    # Weights in compute dtype, biases kept f32 (bias-add / ReLU stay f32 -> fine on v5e too).
    params_k = [(w.astype(compute_dtype), b.astype(jnp.float32)) for (w, b) in params]

    # ---- sublane-align the batch ----
    m_pad = _round_up(max(M, SUBLANE), SUBLANE)
    if m_pad != M:
        xk = jnp.pad(xk, ((0, m_pad - M), (0, 0)))

    kernel = functools.partial(_mlp_kernel, n_layers=n_layers)

    # real (unpadded) FLOPs + param bytes, shared by both paths
    real_flops = sum(2 * w.shape[0] * w.shape[1] for w, _ in params_k)
    param_bytes = sum(w.size * w.dtype.itemsize + b.size * b.dtype.itemsize for w, b in params_k)

    # -------------------- tiny-batch path: single full-array block --------------------
    if m_pad <= 256:
        # Lane-dense (128-padded) output store is free here (single 4 KiB-ish store).
        n_out_pad = _round_up(num_classes, LANE)
        w_last, b_last = params_k[-1]
        if n_out_pad != num_classes:
            w_last = jnp.pad(w_last, ((0, 0), (0, n_out_pad - num_classes)))
            b_last = jnp.pad(b_last, ((0, 0), (0, n_out_pad - num_classes)))
        call_params = list(params_k[:-1]) + [(w_last, b_last)]
        flat_wb = [a for wb in call_params for a in wb]

        cost = pl.CostEstimate(
            flops=m_pad * real_flops,
            transcendentals=0,
            bytes_accessed=int(m_pad * K * item_in + m_pad * n_out_pad * 4 + param_bytes),
        )
        # No grid, no BlockSpecs: whole arrays land in VMEM, one launch.
        out = pl.pallas_call(
            kernel,
            out_shape=jax.ShapeDtypeStruct((m_pad, n_out_pad), jnp.float32),
            cost_estimate=cost,
        )(xk, *flat_wb)
        return out[:M, :num_classes]

    # -------------------- large-batch path: 1-D grid over rows --------------------
    # Always >= 2 tiles so v7x's two TensorCores both get work; tile size up to `tm`.
    n_tiles = max(2, _cdiv(m_pad, tm))
    tm_eff = min(tm, _round_up(_cdiv(m_pad, n_tiles), SUBLANE))
    m_grid_pad = _round_up(m_pad, tm_eff)
    if m_grid_pad != m_pad:
        xk = jnp.pad(xk, ((0, m_grid_pad - m_pad), (0, 0)))

    flat_wb = [a for wb in params_k for a in wb]

    in_specs = [pl.BlockSpec((tm_eff, K), lambda i: (i, 0))]
    # Constant index maps: Pallas skips the re-copy when a block index does not change
    # between grid steps, so the tiny weights/biases stay resident in VMEM.
    for w, b in params_k:
        in_specs.append(pl.BlockSpec(w.shape, lambda i: (0, 0)))
        in_specs.append(pl.BlockSpec(b.shape, lambda i: (0, 0)))

    cost = pl.CostEstimate(
        flops=m_grid_pad * real_flops,
        transcendentals=0,
        bytes_accessed=int(m_grid_pad * K * item_in + m_grid_pad * num_classes * 4 + param_bytes),
    )

    # VMEM footprint: double-buffered x & out tiles + (resident) params + f32 intermediates.
    hidden_sum = sum(w.shape[1] for w, _ in params_k)
    footprint = (2 * tm_eff * K * item_in
                 + 2 * tm_eff * num_classes * 4
                 + 2 * param_bytes
                 + tm_eff * hidden_sum * 4)
    vmem_limit = int(min(48 * 1024 * 1024, max(2 * footprint, 16 * 1024 * 1024)))

    out = pl.pallas_call(
        kernel,
        out_shape=jax.ShapeDtypeStruct((m_grid_pad, num_classes), jnp.float32),
        grid=(m_grid_pad // tm_eff,),
        in_specs=in_specs,
        # Narrow (num_classes-wide) store: a few masked vst ops beat 128x the HBM bytes.
        out_specs=pl.BlockSpec((tm_eff, num_classes), lambda i: (i, 0)),
        compiler_params=pltpu.CompilerParams(
            dimension_semantics=("parallel",),   # shard row tiles across TCs (v7x megacore)
            vmem_limit_bytes=vmem_limit,
        ),
        cost_estimate=cost,
    )(xk, *flat_wb)
    return out[:M, :num_classes]


def init_custom_nn_params(key, n_var: int, layers_params: list, num_classes: int = 1):
    """Deterministic init matching nn.Linear's default U(-1/sqrt(fan_in), 1/sqrt(fan_in))."""
    dims = [n_var] + list(layers_params) + [num_classes]
    params = []
    for i in range(len(dims) - 1):
        fan_in, fan_out = dims[i], dims[i + 1]
        key, kw, kb = jax.random.split(key, 3)
        bound = 1.0 / jnp.sqrt(jnp.float32(fan_in))
        w = jax.random.uniform(kw, (fan_in, fan_out), jnp.float32, -bound, bound)
        b = jax.random.uniform(kb, (1, fan_out), jnp.float32, -bound, bound)
        params.append((w, b))
    return params


def custom_nn_ref(x, params):
    """Pure-JAX reference for verification."""
    n_layers = len(params)
    for i, (w, b) in enumerate(params):
        x = x @ w + b
        if i < n_layers - 1:
            x = jnp.maximum(x, 0.0)
    return x


if __name__ == "__main__":
    key = jax.random.PRNGKey(0)
    n_var = 32
    layers_params = [64, 32]   # >= 2 hidden layers, as required by the module
    num_classes = 1

    params = init_custom_nn_params(key, n_var, layers_params, num_classes)

    # ---- small batch: single-block path ----
    key, kx1 = jax.random.split(key)
    x_small = jax.random.normal(kx1, (8, n_var), jnp.float32)
    out_small = jax.block_until_ready(jax.jit(custom_nn_forward)(x_small, params))
    ref_small = custom_nn_ref(x_small, params)
    assert out_small.shape == (8, num_classes)
    assert jnp.allclose(out_small, ref_small, atol=1e-5, rtol=1e-5)

    # ---- moderate batch: gridded path (>= 2 row tiles, narrow output store) ----
    key, kx2 = jax.random.split(key)
    x_big = jax.random.normal(kx2, (600, n_var), jnp.float32)
    out_big = jax.block_until_ready(jax.jit(custom_nn_forward)(x_big, params))
    ref_big = custom_nn_ref(x_big, params)
    assert out_big.shape == (600, num_classes)
    assert jnp.allclose(out_big, ref_big, atol=1e-5, rtol=1e-5)

    # ---- optional bf16 compute path (halves HBM traffic on the mem-bound gridded path) ----
    fwd_bf16 = jax.jit(functools.partial(custom_nn_forward, cast_to_bf16=True))
    out_bf16 = jax.block_until_ready(fwd_bf16(x_big, params))
    assert jnp.allclose(out_bf16, ref_big, atol=1e-1, rtol=1e-1)

    print("KERNEL_OK")
</pallas_src>

<mosaic_0001>
module attributes {stable_mosaic.version = 11 : i64} {
  func.func @_mlp_kernel(%arg0: memref<8x32xf32, #tpu.memory_space<vmem>>, %arg1: memref<32x64xf32, #tpu.memory_space<vmem>>, %arg2: memref<1x64xf32, #tpu.memory_space<vmem>>, %arg3: memref<64x32xf32, #tpu.memory_space<vmem>>, %arg4: memref<1x32xf32, #tpu.memory_space<vmem>>, %arg5: memref<32x128xf32, #tpu.memory_space<vmem>>, %arg6: memref<1x128xf32, #tpu.memory_space<vmem>>, %arg7: memref<8x128xf32, #tpu.memory_space<vmem>>) attributes {dimension_semantics = [], scalar_prefetch = 0 : i64, scratch_operands = 0 : i64, tpu.core_type = #tpu.core_type<tc>} {
    %c0 = arith.constant 0 : index
    %c0_0 = arith.constant 0 : index
    %0 = vector.load %arg0[%c0, %c0_0] : memref<8x32xf32, #tpu.memory_space<vmem>>, vector<8x32xf32>
    %c0_1 = arith.constant 0 : index
    %c0_2 = arith.constant 0 : index
    %1 = vector.load %arg1[%c0_1, %c0_2] : memref<32x64xf32, #tpu.memory_space<vmem>>, vector<32x64xf32>
    %c0_3 = arith.constant 0 : index
    %c0_4 = arith.constant 0 : index
    %2 = vector.load %arg2[%c0_3, %c0_4] : memref<1x64xf32, #tpu.memory_space<vmem>>, vector<1x64xf32>
    %cst = arith.constant dense<0.000000e+00> : vector<8x64xf32>
    %3 = tpu.matmul %0, %1, %cst {dimension_numbers = #tpu.dot_dimension_numbers<[1], [0], [0], [1], [0, 0, 1, 1], [], []>} : vector<8x32xf32>, vector<32x64xf32>, vector<8x64xf32> -> vector<8x64xf32>
    %4 = vector.broadcast %2 : vector<1x64xf32> to vector<8x64xf32>
    %5 = arith.addf %3, %4 : vector<8x64xf32>
    %cst_5 = arith.constant 0.000000e+00 : f32
    %6 = vector.broadcast %cst_5 : f32 to vector<8x64xf32>
    %7 = arith.maximumf %5, %6 : vector<8x64xf32>
    %c0_6 = arith.constant 0 : index
    %c0_7 = arith.constant 0 : index
    %8 = vector.load %arg3[%c0_6, %c0_7] : memref<64x32xf32, #tpu.memory_space<vmem>>, vector<64x32xf32>
    %c0_8 = arith.constant 0 : index
    %c0_9 = arith.constant 0 : index
    %9 = vector.load %arg4[%c0_8, %c0_9] : memref<1x32xf32, #tpu.memory_space<vmem>>, vector<1x32xf32>
    %cst_10 = arith.constant dense<0.000000e+00> : vector<8x32xf32>
    %10 = tpu.matmul %7, %8, %cst_10 {dimension_numbers = #tpu.dot_dimension_numbers<[1], [0], [0], [1], [0, 0, 1, 1], [], []>} : vector<8x64xf32>, vector<64x32xf32>, vector<8x32xf32> -> vector<8x32xf32>
    %11 = vector.broadcast %9 : vector<1x32xf32> to vector<8x32xf32>
    %12 = arith.addf %10, %11 : vector<8x32xf32>
    %cst_11 = arith.constant 0.000000e+00 : f32
    %13 = vector.broadcast %cst_11 : f32 to vector<8x32xf32>
    %14 = arith.maximumf %12, %13 : vector<8x32xf32>
    %c0_12 = arith.constant 0 : index
    %c0_13 = arith.constant 0 : index
    %15 = vector.load %arg5[%c0_12, %c0_13] : memref<32x128xf32, #tpu.memory_space<vmem>>, vector<32x128xf32>
    %c0_14 = arith.constant 0 : index
    %c0_15 = arith.constant 0 : index
    %16 = vector.load %arg6[%c0_14, %c0_15] : memref<1x128xf32, #tpu.memory_space<vmem>>, vector<1x128xf32>
    %cst_16 = arith.constant dense<0.000000e+00> : vector<8x128xf32>
    %17 = tpu.matmul %14, %15, %cst_16 {dimension_numbers = #tpu.dot_dimension_numbers<[1], [0], [0], [1], [0, 0, 1, 1], [], []>} : vector<8x32xf32>, vector<32x128xf32>, vector<8x128xf32> -> vector<8x128xf32>
    %18 = vector.broadcast %16 : vector<1x128xf32> to vector<8x128xf32>
    %19 = arith.addf %17, %18 : vector<8x128xf32>
    %c0_17 = arith.constant 0 : index
    %c0_18 = arith.constant 0 : index
    %20 = vector.load %arg7[%c0_17, %c0_18] : memref<8x128xf32, #tpu.memory_space<vmem>>, vector<8x128xf32>
    tpu.vector_store %arg7[%c0_17, %c0_18], %19 {strides = array<i32>} : memref<8x128xf32, #tpu.memory_space<vmem>>, vector<8x128xf32>,
    return
  }
}

</mosaic_0001>

<llo_original>
// kernel: custom_nn_forward.1
$region0: #{custom_nn_forward.1}
  #allocation0 [shape = 'u32[]', space=smem, size = 0x4, offset = 0x4, fixed_abs, tag = 'smem constant byte address 0x4 - core index']
  #allocation1 [shape = 'u32[144,128]{1,0:T(1,128)}', space=vmem, size = 0x12000, scoped, tag = 'internal scratch']
  %s0 = inlined_call_operand.vmem [shape: f32[8,32], index: 0, kind: input, shape index: {}]
  %s1 = inlined_call_operand.vmem [shape: f32[32,64], index: 1, kind: input, shape index: {}]
  %s2 = inlined_call_operand.vmem [shape: f32[1,64], index: 2, kind: input, shape index: {}]
  %s3 = inlined_call_operand.vmem [shape: f32[64,32], index: 3, kind: input, shape index: {}]
  %s4 = inlined_call_operand.vmem [shape: f32[1,32], index: 4, kind: input, shape index: {}]
  %s5 = inlined_call_operand.vmem [shape: f32[32,128], index: 5, kind: input, shape index: {}]
  %s6 = inlined_call_operand.vmem [shape: f32[1,128], index: 6, kind: input, shape index: {}]
  %s7 = inlined_call_operand.vmem [shape: f32[8,128], index: 7, kind: output, shape index: {}]
  %s8 = sld [smem:[#allocation0]]
  $region38: #{custom_nn_forward.1} parent=0
    _
  %s10 = ssub.s32 1, %s8
  %s11 = scalar_select 0, %s10, %s8
  // Predicated region
  $region2: #{custom_nn_forward.1} parent=0 // pred_check
    _
  $region3: #{custom_nn_forward.1} parent=0 // pred_check_branch
    %13 = sbr.rel (0) target = $region5
  $region4: #{custom_nn_forward.1} parent=0 // pred_region
    _
  $region5: #{custom_nn_forward.1} parent=0 // pred_fallthru
    _
  // Predicated region
  $region6: #{custom_nn_forward.1} parent=0 // pred_check
    _
  $region7: #{custom_nn_forward.1} parent=0 // pred_check_branch
    %15 = sbr.rel (0) target = $region9
  $region8: #{custom_nn_forward.1} parent=0 // pred_region
    _
  $region9: #{custom_nn_forward.1} parent=0 // pred_fallthru
    _
  // Predicated region
  $region10: #{custom_nn_forward.1} parent=0 // pred_check
    _
  $region11: #{custom_nn_forward.1} parent=0 // pred_check_branch
    %17 = sbr.rel (0) target = $region13
  $region12: #{custom_nn_forward.1} parent=0 // pred_region
    _
  $region13: #{custom_nn_forward.1} parent=0 // pred_fallthru
    _
  // Predicated region
  $region14: #{custom_nn_forward.1} parent=0 // pred_check
    _
  $region15: #{custom_nn_forward.1} parent=0 // pred_check_branch
    %19 = sbr.rel (0) target = $region17
  $region16: #{custom_nn_forward.1} parent=0 // pred_region
    _
  $region17: #{custom_nn_forward.1} parent=0 // pred_fallthru
    _
  // Predicated region
  $region18: #{custom_nn_forward.1} parent=0 // pred_check
    _
  $region19: #{custom_nn_forward.1} parent=0 // pred_check_branch
    %21 = sbr.rel (0) target = $region21
  $region20: #{custom_nn_forward.1} parent=0 // pred_region
    _
  $region21: #{custom_nn_forward.1} parent=0 // pred_fallthru
    _
  // Predicated region
  $region22: #{custom_nn_forward.1} parent=0 // pred_check
    _
  $region23: #{custom_nn_forward.1} parent=0 // pred_check_branch
    %23 = sbr.rel (0) target = $region25
  $region24: #{custom_nn_forward.1} parent=0 // pred_region
    _
  $region25: #{custom_nn_forward.1} parent=0 // pred_fallthru
    _
  // Predicated region
  $region26: #{custom_nn_forward.1} parent=0 // pred_check
    _
  $region27: #{custom_nn_forward.1} parent=0 // pred_check_branch
    %25 = sbr.rel (0) target = $region29
  $region28: #{custom_nn_forward.1} parent=0 // pred_region
    _
  $region29: #{custom_nn_forward.1} parent=0 // pred_fallthru
    _
  %v26 = vld [vmem:[%s0] sm:$0xff]
  %v27 = vld [vmem:[%s1] sm:$0xff]
  %v28 = vld [vmem:[%s1 + $0x8] sm:$0xff]
  %v29 = vld [vmem:[%s1 + $0x10] sm:$0xff]
  %v30 = vld [vmem:[%s1 + $0x18] sm:$0xff]
  %v31 = vld [vmem:[%s2] sm:$0x1]
  %v33 = vlaneseq
  %v34 = vshrl.u32 %v33, 7
  %v35 = vsub.s32 0, %v34
  %v36 = vrot.slane %v31, %v35
  %vm38 = vcmask 261120
  %v40 = vsel %vm38, %v26, 0
  %42 = vmatprep.subr.mxu0 0.0
  %43 = vmatpush1.msra.mxu0 %v27
  %44 = vmatprep.subr.mxu0 0.0
  %45 = vmatpush1.msra.mxu0 %v28
  %46 = vmatprep.subr.mxu0 0.0
  %47 = vmatpush1.msra.mxu0 %v29
  %48 = vmatprep.subr.mxu0 0.0
  %49 = vmatpush1.msra.mxu0 %v30
  %50 = vmatprep.subr.mxu0 0.0
  %51 = vmatpush1.msra.mxu0 0.0
  %52 = vmatprep.subr.mxu0 0.0
  %53 = vmatpush1.msra.mxu0 0.0
  %54 = vmatprep.subr.mxu0 0.0
  %55 = vmatpush1.msra.mxu0 0.0
  %56 = vmatprep.subr.mxu0 0.0
  %57 = vmatpush1.msra.mxu0 0.0
  %58 = vmatprep.subr.mxu0 0.0
  %59 = vmatpush1.msra.mxu0 0.0
  %60 = vmatprep.subr.mxu0 0.0
  %61 = vmatpush1.msra.mxu0 0.0
  %62 = vmatprep.subr.mxu0 0.0
  %63 = vmatpush1.msra.mxu0 0.0
  %64 = vmatprep.subr.mxu0 0.0
  %65 = vmatpush1.msra.mxu0 0.0
  %66 = vmatprep.subr.mxu0 0.0
  %67 = vmatpush1.msra.mxu0 0.0
  %68 = vmatprep.subr.mxu0 0.0
  %69 = vmatpush1.msra.mxu0 0.0
  %70 = vmatprep.subr.mxu0 0.0
  %71 = vmatpush1.msra.mxu0 0.0
  %72 = vmatprep.subr.mxu0 0.0
  %73 = vmatpush1.msra.mxu0 0.0
  %74 = vmatprep.subr.mxu0 0.0
  %75 = vmatpush1.msra.mxu0 0.0
  %76 = vmatprep.subr.mxu0 0.0
  %77 = vmatpush1.msra.mxu0 0.0
  %78 = vmatprep.subr.mxu0 0.0
  %79 = vmatpush1.msra.mxu0 0.0
  %80 = vmatprep.subr.mxu0 0.0
  %81 = vmatpush1.msra.mxu0 0.0
  %82 = vmatprep.subr.mxu0 0.0
  %83 = vmatpush1.msra.mxu0 0.0
  %84 = vmatprep.subr.mxu0 0.0
  %85 = vmatpush1.msra.mxu0 0.0
  %86 = vmatprep.subr.mxu0 0.0
  %87 = vmatpush1.msra.mxu0 0.0
  %88 = vmatprep.subr.mxu0 0.0
  %89 = vmatpush1.msra.mxu0 0.0
  %90 = vmatprep.subr.mxu0 0.0
  %91 = vmatpush1.msra.mxu0 0.0
  %92 = vmatprep.subr.mxu0 0.0
  %93 = vmatpush1.msra.mxu0 0.0
  %94 = vmatprep.subr.mxu0 0.0
  %95 = vmatpush1.msra.mxu0 0.0
  %96 = vmatprep.subr.mxu0 0.0
  %97 = vmatpush1.msra.mxu0 0.0
  %98 = vmatprep.subr.mxu0 0.0
  %99 = vmatpush1.msra.mxu0 0.0
  %100 = vmatprep.subr.mxu0 0.0
  %101 = vmatpush1.msra.mxu0 0.0
  %102 = vmatprep.subr.mxu0 0.0
  %103 = vmatpush1.msra.mxu0 0.0
  %104 = vmatprep.subr.mxu0 0.0
  %105 = vmatpush1.msra.mxu0 0.0
  %106 = vmatprep.mubr.f32.mxu0 0.0
  %107 = vmatmul.mubr.f32.gmra.mrb[0].mxu0 %v40
  %v108 = vpop.f32.mrb[0].mxu0
  %v109 = vadd.f32 %v36, %v108
  %v110 = vpop.f32.mrb[0].mxu0
  %111 = vdwg.mxu0
  %v112 = vmax.f32 %v109, 0.0
  %v113 = vld [vmem:[%s3] sm:$0xff]
  %v114 = vld [vmem:[%s3 + $0x8] sm:$0xff]
  %v115 = vld [vmem:[%s3 + $0x10] sm:$0xff]
  %v116 = vld [vmem:[%s3 + $0x18] sm:$0xff]
  %v117 = vld [vmem:[%s3 + $0x20] sm:$0xff]
  %v118 = vld [vmem:[%s3 + $0x28] sm:$0xff]
  %v119 = vld [vmem:[%s3 + $0x30] sm:$0xff]
  %v120 = vld [vmem:[%s3 + $0x38] sm:$0xff]
  %v121 = vld [vmem:[%s4] sm:$0x1]
  %v123 = vlaneseq
  %v124 = vshrl.u32 %v123, 7
  %v125 = vsub.s32 0, %v124
  %v126 = vrot.slane %v121, %v125
  %vm128 = vcmask 523264
  %v130 = vsel %vm128, %v112, 0
  %132 = vmatprep.subr.mxu0 0.0
  %133 = vmatpush1.msra.mxu0 %v113
  %134 = vmatprep.subr.mxu0 0.0
  %135 = vmatpush1.msra.mxu0 %v114
  %136 = vmatprep.subr.mxu0 0.0
  %137 = vmatpush1.msra.mxu0 %v115
  %138 = vmatprep.subr.mxu0 0.0
  %139 = vmatpush1.msra.mxu0 %v116
  %140 = vmatprep.subr.mxu0 0.0
  %141 = vmatpush1.msra.mxu0 %v117
  %142 = vmatprep.subr.mxu0 0.0
  %143 = vmatpush1.msra.mxu0 %v118
  %144 = vmatprep.subr.mxu0 0.0
  %145 = vmatpush1.msra.mxu0 %v119
  %146 = vmatprep.subr.mxu0 0.0
  %147 = vmatpush1.msra.mxu0 %v120
  %148 = vmatprep.subr.mxu0 0.0
  %149 = vmatpush1.msra.mxu0 0.0
  %150 = vmatprep.subr.mxu0 0.0
  %151 = vmatpush1.msra.mxu0 0.0
  %152 = vmatprep.subr.mxu0 0.0
  %153 = vmatpush1.msra.mxu0 0.0
  %154 = vmatprep.subr.mxu0 0.0
  %155 = vmatpush1.msra.mxu0 0.0
  %156 = vmatprep.subr.mxu0 0.0
  %157 = vmatpush1.msra.mxu0 0.0
  %158 = vmatprep.subr.mxu0 0.0
  %159 = vmatpush1.msra.mxu0 0.0
  %160 = vmatprep.subr.mxu0 0.0
  %161 = vmatpush1.msra.mxu0 0.0
  %162 = vmatprep.subr.mxu0 0.0
  %163 = vmatpush1.msra.mxu0 0.0
  %164 = vmatprep.subr.mxu0 0.0
  %165 = vmatpush1.msra.mxu0 0.0
  %166 = vmatprep.subr.mxu0 0.0
  %167 = vmatpush1.msra.mxu0 0.0
  %168 = vmatprep.subr.mxu0 0.0
  %169 = vmatpush1.msra.mxu0 0.0
  %170 = vmatprep.subr.mxu0 0.0
  %171 = vmatpush1.msra.mxu0 0.0
  %172 = vmatprep.subr.mxu0 0.0
  %173 = vmatpush1.msra.mxu0 0.0
  %174 = vmatprep.subr.mxu0 0.0
  %175 = vmatpush1.msra.mxu0 0.0
  %176 = vmatprep.subr.mxu0 0.0
  %177 = vmatpush1.msra.mxu0 0.0
  %178 = vmatprep.subr.mxu0 0.0
  %179 = vmatpush1.msra.mxu0 0.0
  %180 = vmatprep.subr.mxu0 0.0
  %181 = vmatpush1.msra.mxu0 0.0
  %182 = vmatprep.subr.mxu0 0.0
  %183 = vmatpush1.msra.mxu0 0.0
  %184 = vmatprep.subr.mxu0 0.0
  %185 = vmatpush1.msra.mxu0 0.0
  %186 = vmatprep.subr.mxu0 0.0
  %187 = vmatpush1.msra.mxu0 0.0
  %188 = vmatprep.subr.mxu0 0.0
  %189 = vmatpush1.msra.mxu0 0.0
  %190 = vmatprep.subr.mxu0 0.0
  %191 = vmatpush1.msra.mxu0 0.0
  %192 = vmatprep.subr.mxu0 0.0
  %193 = vmatpush1.msra.mxu0 0.0
  %194 = vmatprep.subr.mxu0 0.0
  %195 = vmatpush1.msra.mxu0 0.0
  %196 = vmatprep.mubr.f32.mxu0 0.0
  %197 = vmatmul.mubr.f32.gmra.mrb[0].mxu0 %v130
  %v198 = vpop.f32.mrb[0].mxu0
  %v199 = vadd.f32 %v126, %v198
  %v200 = vpop.f32.mrb[0].mxu0
  %201 = vdwg.mxu0
  %v202 = vmax.f32 %v199, 0.0
  %v203 = vld [vmem:[%s5] sm:$0xff]
  %v204 = vld [vmem:[%s5 + $0x8] sm:$0xff]
  %v205 = vld [vmem:[%s5 + $0x10] sm:$0xff]
  %v206 = vld [vmem:[%s5 + $0x18] sm:$0xff]
  %v207 = vld [vmem:[%s6] sm:$0x1]
  %v209 = vlaneseq
  %v210 = vshrl.u32 %v209, 7
  %v211 = vsub.s32 0, %v210
  %v212 = vrot.slane %v207, %v211
  %v215 = vsel %vm38, %v202, 0
  %217 = vmatprep.subr.mxu0 0.0
  %218 = vmatpush1.msra.mxu0 %v203
  %219 = vmatprep.subr.mxu0 0.0
  %220 = vmatpush1.msra.mxu0 %v204
  %221 = vmatprep.subr.mxu0 0.0
  %222 = vmatpush1.msra.mxu0 %v205
  %223 = vmatprep.subr.mxu0 0.0
  %224 = vmatpush1.msra.mxu0 %v206
  %225 = vmatprep.subr.mxu0 0.0
  %226 = vmatpush1.msra.mxu0 0.0
  %227 = vmatprep.subr.mxu0 0.0
  %228 = vmatpush1.msra.mxu0 0.0
  %229 = vmatprep.subr.mxu0 0.0
  %230 = vmatpush1.msra.mxu0 0.0
  %231 = vmatprep.subr.mxu0 0.0
  %232 = vmatpush1.msra.mxu0 0.0
  %233 = vmatprep.subr.mxu0 0.0
  %234 = vmatpush1.msra.mxu0 0.0
  %235 = vmatprep.subr.mxu0 0.0
  %236 = vmatpush1.msra.mxu0 0.0
  %237 = vmatprep.subr.mxu0 0.0
  %238 = vmatpush1.msra.mxu0 0.0
  %239 = vmatprep.subr.mxu0 0.0
  %240 = vmatpush1.msra.mxu0 0.0
  %241 = vmatprep.subr.mxu0 0.0
  %242 = vmatpush1.msra.mxu0 0.0
  %243 = vmatprep.subr.mxu0 0.0
  %244 = vmatpush1.msra.mxu0 0.0
  %245 = vmatprep.subr.mxu0 0.0
  %246 = vmatpush1.msra.mxu0 0.0
  %247 = vmatprep.subr.mxu0 0.0
  %248 = vmatpush1.msra.mxu0 0.0
  %249 = vmatprep.subr.mxu0 0.0
  %250 = vmatpush1.msra.mxu0 0.0
  %251 = vmatprep.subr.mxu0 0.0
  %252 = vmatpush1.msra.mxu0 0.0
  %253 = vmatprep.subr.mxu0 0.0
  %254 = vmatpush1.msra.mxu0 0.0
  %255 = vmatprep.subr.mxu0 0.0
  %256 = vmatpush1.msra.mxu0 0.0
  %257 = vmatprep.subr.mxu0 0.0
  %258 = vmatpush1.msra.mxu0 0.0
  %259 = vmatprep.subr.mxu0 0.0
  %260 = vmatpush1.msra.mxu0 0.0
  %261 = vmatprep.subr.mxu0 0.0
  %262 = vmatpush1.msra.mxu0 0.0
  %263 = vmatprep.subr.mxu0 0.0
  %264 = vmatpush1.msra.mxu0 0.0
  %265 = vmatprep.subr.mxu0 0.0
  %266 = vmatpush1.msra.mxu0 0.0
  %267 = vmatprep.subr.mxu0 0.0
  %268 = vmatpush1.msra.mxu0 0.0
  %269 = vmatprep.subr.mxu0 0.0
  %270 = vmatpush1.msra.mxu0 0.0
  %271 = vmatprep.subr.mxu0 0.0
  %272 = vmatpush1.msra.mxu0 0.0
  %273 = vmatprep.subr.mxu0 0.0
  %274 = vmatpush1.msra.mxu0 0.0
  %275 = vmatprep.subr.mxu0 0.0
  %276 = vmatpush1.msra.mxu0 0.0
  %277 = vmatprep.subr.mxu0 0.0
  %278 = vmatpush1.msra.mxu0 0.0
  %279 = vmatprep.subr.mxu0 0.0
  %280 = vmatpush1.msra.mxu0 0.0
  %281 = vmatprep.mubr.f32.mxu0 0.0
  %282 = vmatmul.mubr.f32.gmra.mrb[0].mxu0 %v215
  %v283 = vpop.f32.mrb[0].mxu0
  %v284 = vadd.f32 %v212, %v283
  %v285 = vpop.f32.mrb[0].mxu0
  %286 = vdwg.mxu0
  %287 = vst [vmem:[%s7] sm:$0xff] %v284
  // Predicated region
  $region30: #{custom_nn_forward.1} parent=0 // pred_check
    _
  $region31: #{custom_nn_forward.1} parent=0 // pred_check_branch
    %289 = sbr.rel (0) target = $region33
  $region32: #{custom_nn_forward.1} parent=0 // pred_region
    _
  $region33: #{custom_nn_forward.1} parent=0 // pred_fallthru
    _
  // Predicated region
  $region34: #{custom_nn_forward.1} parent=0 // pred_check
    _
  $region35: #{custom_nn_forward.1} parent=0 // pred_check_branch
    %291 = sbr.rel (0) target = $region37
  $region36: #{custom_nn_forward.1} parent=0 // pred_region
    _
  $region37: #{custom_nn_forward.1} parent=0 // pred_fallthru
    _

</llo_original>
